<compile_context>
chip_gen: v7x
topology: tpu7x:2x2x1
jax: 0.10.0
libtpu: 0.0.40
codegen_flags: <defaults>
</compile_context>

<pallas_src>
import math
import functools

import jax
import jax.numpy as jnp
from jax.experimental import pallas as pl
from jax.experimental.pallas import tpu as pltpu


_NEG_INIT = -1e30  # finite "-inf": exp(old_max - new_max) underflows to 0, no inf-inf NaN


def _arcmargin_kernel(feat_ref, w_ref, invw_ref, label_ref, out_ref,
                      featn_ref, m_ref, s_ref, t_ref, *,
                      scale, cos_m, sin_m, th, mm, easy_margin,
                      feature_norm, ls_eps, label_size, tile_l, needs_col_mask):
    j = pl.program_id(1)

    @pl.when(j == 0)
    def _init():
        f = feat_ref[...].astype(jnp.float32)
        if feature_norm:
            ssq = jnp.sum(f * f, axis=1, keepdims=True)
            f = f * jax.lax.rsqrt(jnp.maximum(ssq, 1e-24))  # == x / max(||x||, 1e-12)
        featn_ref[...] = f.astype(featn_ref.dtype)
        m_ref[...] = jnp.full(m_ref.shape, _NEG_INIT, dtype=m_ref.dtype)
        s_ref[...] = jnp.zeros(s_ref.shape, dtype=s_ref.dtype)
        t_ref[...] = jnp.zeros(t_ref.shape, dtype=t_ref.dtype)

    # cosine tile: contract on D (last dim of BOTH operands) -> MXU-friendly, no transpose;
    # fold the hoisted weight-row inverse norms in as a (1, TILE_L) broadcast.
    raw = jax.lax.dot_general(
        featn_ref[...], w_ref[...],
        dimension_numbers=(((1,), (1,)), ((), ())),
        preferred_element_type=jnp.float32)
    cos = raw * invw_ref[...]

    # clamp avoids NaN when cos^2 exceeds 1 by rounding (guaranteed with feature_norm=False)
    sine = jnp.sqrt(jnp.maximum(1.0 - cos * cos, 0.0))

    # scale folded into the margin constants so the selected value is already scaled
    cos_s = cos * jnp.float32(scale)
    phi_s = cos * jnp.float32(cos_m * scale) - sine * jnp.float32(sin_m * scale)
    if easy_margin:
        phi_s = jnp.where(cos > 0.0, phi_s, cos_s)
    else:
        phi_s = jnp.where(cos > jnp.float32(th), phi_s, cos_s - jnp.float32(mm * scale))

    lbl = label_ref[...]                                            # (TILE_B, 1) int32
    col = jax.lax.broadcasted_iota(jnp.int32, cos.shape, 1) + j * tile_l
    is_target = col == lbl                                          # reused for CE target

    if ls_eps > 0.0:
        # TODO(synk): PyTorch code references self.out_features (undefined attr) here;
        # label_size is the obvious intent and is what we use.
        base = ls_eps / label_size
        oh = jnp.where(is_target, jnp.float32(1.0 - ls_eps + base), jnp.float32(base))
        logits = cos_s + oh * (phi_s - cos_s)   # == scale*(oh*phi + (1-oh)*cos)
    else:
        logits = jnp.where(is_target, phi_s, cos_s)

    if needs_col_mask:  # static: only when label_size was padded up to a tile multiple
        logits = jnp.where(col < label_size, logits, jnp.float32(_NEG_INIT))

    # online logsumexp across the class (L) grid axis
    m_old = m_ref[...]
    m_new = jnp.maximum(m_old, jnp.max(logits, axis=1, keepdims=True))
    alpha = jnp.exp(m_old - m_new)
    p = jnp.exp(logits - m_new)
    s_ref[...] = alpha * s_ref[...] + jnp.sum(p, axis=1, keepdims=True)
    t_ref[...] = t_ref[...] + jnp.sum(jnp.where(is_target, logits, 0.0),
                                      axis=1, keepdims=True)
    m_ref[...] = m_new

    @pl.when(j == pl.num_programs(1) - 1)
    def _finalize():
        # per-row CE loss: logsumexp(logits) - logits[label]
        out_ref[...] = m_ref[...] + jnp.log(s_ref[...]) - t_ref[...]


def _round_up(x, m):
    return (x + m - 1) // m * m


class ArcMarginProductPallas:
    """ArcFace margin product + mean cross-entropy (forward pass only)."""

    def __init__(self, in_features, label_size, scale=30.0, margin=0.5,
                 easy_margin=False, feature_norm=False, ls_eps=0.0, seed=0,
                 compute_dtype=jnp.bfloat16, tile_b=128, tile_l=512):
        self.in_features = in_features
        self.label_size = label_size
        self.scale = float(scale)
        self.margin = float(margin)
        self.easy_margin = easy_margin
        self.feature_norm = feature_norm
        self.ls_eps = float(ls_eps)
        self.cos_m = math.cos(margin)
        self.sin_m = math.sin(margin)
        self.th = math.cos(math.pi - margin)
        self.mm = math.sin(math.pi - margin) * margin
        self.compute_dtype = compute_dtype
        # TILE_B: sublane aligned (mult of 8); clamped to the padded batch at call time.
        self.tile_b = max(8, _round_up(int(tile_b), 8))
        # TILE_L: lane aligned (mult of 128) because the inv-norm block is (1, TILE_L).
        # Keep 2 x (TILE_L x D x dtype) well under scoped VMEM (v7x: 32 MiB default).
        self.tile_l = max(128, _round_up(int(tile_l), 128))

        # Deterministic xavier_uniform_-style init (same fan rule as PyTorch).
        bound = math.sqrt(6.0 / (in_features + label_size))
        self.weight = jax.random.uniform(
            jax.random.PRNGKey(seed), (label_size, in_features),
            dtype=jnp.float32, minval=-bound, maxval=bound)

    def __call__(self, feature, label):
        B = feature.shape[0]
        D = self.in_features
        L = self.label_size
        tile_b = min(self.tile_b, _round_up(B, 8))           # don't over-pad tiny batches
        tile_l = min(self.tile_l, _round_up(L, 128))
        B_pad = _round_up(B, tile_b)
        L_pad = _round_up(L, tile_l)
        needs_col_mask = (L_pad != L)

        feat = feature.astype(jnp.float32)
        lbl = label.astype(jnp.int32).reshape(B, 1)
        if B_pad != B:
            feat = jnp.pad(feat, ((0, B_pad - B), (0, 0)))
            lbl = jnp.pad(lbl, ((0, B_pad - B), (0, 0)))

        # Hoist the weight-row norms out of the per-logit path; stream the raw weight in
        # compute_dtype (bf16 halves the dominant HBM stream and runs the MXU at bf16 rate).
        w32 = self.weight
        inv_wnorm = jax.lax.rsqrt(jnp.maximum(jnp.sum(w32 * w32, axis=1), 1e-24))
        w_c = w32.astype(self.compute_dtype)
        if needs_col_mask:
            w_c = jnp.pad(w_c, ((0, L_pad - L), (0, 0)))
            inv_wnorm = jnp.pad(inv_wnorm, (0, L_pad - L), constant_values=1.0)
        inv_wnorm = inv_wnorm.reshape(1, L_pad).astype(jnp.float32)

        kernel = functools.partial(
            _arcmargin_kernel,
            scale=self.scale, cos_m=self.cos_m, sin_m=self.sin_m,
            th=self.th, mm=self.mm, easy_margin=self.easy_margin,
            feature_norm=self.feature_norm, ls_eps=self.ls_eps,
            label_size=L, tile_l=tile_l, needs_col_mask=needs_col_mask)

        dsize = jnp.dtype(self.compute_dtype).itemsize
        cost = pl.CostEstimate(
            flops=2 * B_pad * L_pad * D + 12 * B_pad * L_pad,
            transcendentals=3 * B_pad * L_pad,
            bytes_accessed=L_pad * D * dsize + L_pad * 4 + B_pad * D * 4 + B_pad * 8)

        per_row = pl.pallas_call(
            kernel,
            out_shape=jax.ShapeDtypeStruct((B_pad, 1), jnp.float32),
            grid_spec=pltpu.PrefetchScalarGridSpec(
                num_scalar_prefetch=0,
                grid=(B_pad // tile_b, L_pad // tile_l),
                in_specs=[
                    pl.BlockSpec((tile_b, D), lambda i, j: (i, 0)),   # feature
                    pl.BlockSpec((tile_l, D), lambda i, j: (j, 0)),   # weight (streamed)
                    pl.BlockSpec((1, tile_l), lambda i, j: (0, j)),   # 1/||w_row||
                    pl.BlockSpec((tile_b, 1), lambda i, j: (i, 0)),   # label
                ],
                out_specs=pl.BlockSpec((tile_b, 1), lambda i, j: (i, 0)),
                scratch_shapes=[
                    pltpu.VMEM((tile_b, D), self.compute_dtype),  # normalized feature tile
                    pltpu.VMEM((tile_b, 1), jnp.float32),         # running max
                    pltpu.VMEM((tile_b, 1), jnp.float32),         # running sum-exp
                    pltpu.VMEM((tile_b, 1), jnp.float32),         # target logit
                ]),
            compiler_params=pltpu.CompilerParams(
                dimension_semantics=("parallel", "arbitrary"),
                vmem_limit_bytes=32 * 1024 * 1024),
            cost_estimate=cost,
        )(feat, w_c, inv_wnorm, lbl)

        return jnp.mean(per_row[:B, 0])


def _reference(module, feature, label):
    """Pure-JAX reference of the PyTorch forward, mirroring the kernel's compute dtype."""
    feat = feature.astype(jnp.float32)
    if module.feature_norm:
        ssq = jnp.sum(feat * feat, axis=1, keepdims=True)
        feat = feat * jax.lax.rsqrt(jnp.maximum(ssq, 1e-24))
    w = module.weight.astype(jnp.float32)
    inv_wn = jax.lax.rsqrt(jnp.maximum(jnp.sum(w * w, axis=1), 1e-24))
    cosine = jax.lax.dot_general(
        feat.astype(module.compute_dtype), w.astype(module.compute_dtype),
        dimension_numbers=(((1,), (1,)), ((), ())),
        preferred_element_type=jnp.float32) * inv_wn[None, :]
    sine = jnp.sqrt(jnp.maximum(1.0 - cosine ** 2, 0.0))
    phi = cosine * module.cos_m - sine * module.sin_m
    if module.easy_margin:
        phi = jnp.where(cosine > 0, phi, cosine)
    else:
        phi = jnp.where(cosine > module.th, phi, cosine - module.mm)
    one_hot = jax.nn.one_hot(label, module.label_size, dtype=jnp.float32)
    if module.ls_eps > 0:
        one_hot = (1 - module.ls_eps) * one_hot + module.ls_eps / module.label_size
    logits = (one_hot * phi + (1.0 - one_hot) * cosine) * module.scale
    logp = jax.nn.log_softmax(logits, axis=-1)
    return -jnp.mean(jnp.take_along_axis(logp, label[:, None].astype(jnp.int32), axis=1))


if __name__ == "__main__":
    key = jax.random.PRNGKey(0)
    k1, k2, k3, k4 = jax.random.split(key, 4)

    # Config 1: f32 compute path; label_size=200 is not a tile multiple, exercising the
    # padded-class masking, and B=16 with TILE_B=8 exercises the parallel batch axis.
    B1, D1, L1 = 16, 32, 200
    feat1 = jax.random.normal(k1, (B1, D1), dtype=jnp.float32)
    lab1 = jax.random.randint(k2, (B1,), 0, L1, dtype=jnp.int32)
    mod1 = ArcMarginProductPallas(D1, L1, scale=30.0, margin=0.5,
                                  easy_margin=False, feature_norm=True, ls_eps=0.0,
                                  seed=0, compute_dtype=jnp.float32,
                                  tile_b=8, tile_l=128)
    loss1 = mod1(feat1, lab1)
    jax.block_until_ready(loss1)
    ref1 = _reference(mod1, feat1, lab1)
    assert jnp.allclose(loss1, ref1, rtol=2e-3, atol=2e-3), (loss1, ref1)

    # Config 2: production path — bf16 weight/feature stream into the MXU, label smoothing,
    # easy margin, and batch padding (B=12 -> 16).
    B2, D2, L2 = 12, 32, 256
    feat2 = jax.random.normal(k3, (B2, D2), dtype=jnp.float32)
    lab2 = jax.random.randint(k4, (B2,), 0, L2, dtype=jnp.int32)
    mod2 = ArcMarginProductPallas(D2, L2, scale=30.0, margin=0.5,
                                  easy_margin=True, feature_norm=True, ls_eps=0.1,
                                  seed=1, compute_dtype=jnp.bfloat16,
                                  tile_b=8, tile_l=128)
    loss2 = mod2(feat2, lab2)
    jax.block_until_ready(loss2)
    ref2 = _reference(mod2, feat2, lab2)   # reference mirrors the bf16 matmul precision
    assert jnp.allclose(loss2, ref2, rtol=1e-2, atol=1e-2), (loss2, ref2)

    print("KERNEL_OK")
</pallas_src>

<mosaic_0001>
module attributes {stable_mosaic.version = 11 : i64} {
  func.func @_arcmargin_kernel(%arg0: i32, %arg1: i32, %arg2: memref<8x32xf32, #tpu.memory_space<vmem>>, %arg3: memref<128x32xf32, #tpu.memory_space<vmem>>, %arg4: memref<1x128xf32, #tpu.memory_space<vmem>>, %arg5: memref<8x1xi32, #tpu.memory_space<vmem>>, %arg6: memref<8x1xf32, #tpu.memory_space<vmem>>, %arg7: memref<8x32xf32, #tpu.memory_space<vmem>>, %arg8: memref<8x1xf32, #tpu.memory_space<vmem>>, %arg9: memref<8x1xf32, #tpu.memory_space<vmem>>, %arg10: memref<8x1xf32, #tpu.memory_space<vmem>>) attributes {dimension_semantics = [#tpu.dimension_semantics<parallel>, #tpu.dimension_semantics<arbitrary>], iteration_bounds = array<i64: 2, 2>, scalar_prefetch = 0 : i64, scratch_operands = 4 : i64, tpu.core_type = #tpu.core_type<tc>, window_params = [{transform_indices = @transform_0, window_bounds = array<i64: 8, 32>}, {transform_indices = @transform_1, window_bounds = array<i64: 128, 32>}, {transform_indices = @transform_2, window_bounds = array<i64: 1, 128>}, {transform_indices = @transform_3, window_bounds = array<i64: 8, 1>}, {transform_indices = @transform_4, window_bounds = array<i64: 8, 1>}]} {
    %c0_i32 = arith.constant 0 : i32
    %0 = arith.cmpi eq, %arg1, %c0_i32 : i32
    %1 = arith.extui %0 : i1 to i32
    %c0_i32_0 = arith.constant 0 : i32
    %2 = arith.cmpi ne, %1, %c0_i32_0 : i32
    scf.if %2 {
      %c0_33 = arith.constant 0 : index
      %c0_34 = arith.constant 0 : index
      %65 = vector.load %arg2[%c0_33, %c0_34] : memref<8x32xf32, #tpu.memory_space<vmem>>, vector<8x32xf32>
      %66 = arith.mulf %65, %65 : vector<8x32xf32>
      %cst_35 = arith.constant dense<0.000000e+00> : vector<8xf32>
      %67 = vector.multi_reduction <add>, %66, %cst_35 [1] : vector<8x32xf32> to vector<8xf32>
      %68 = vector.shape_cast %67 : vector<8xf32> to vector<8x1xf32>
      %cst_36 = arith.constant 1.000000e-24 : f32
      %69 = vector.broadcast %cst_36 : f32 to vector<8x1xf32>
      %70 = arith.maximumf %68, %69 : vector<8x1xf32>
      %71 = math.rsqrt %70 : vector<8x1xf32>
      %72 = vector.broadcast %71 : vector<8x1xf32> to vector<8x32xf32>
      %73 = arith.mulf %65, %72 : vector<8x32xf32>
      %c0_37 = arith.constant 0 : index
      %c0_38 = arith.constant 0 : index
      %74 = vector.load %arg7[%c0_37, %c0_38] : memref<8x32xf32, #tpu.memory_space<vmem>>, vector<8x32xf32>
      tpu.vector_store %arg7[%c0_37, %c0_38], %73 {strides = array<i32>} : memref<8x32xf32, #tpu.memory_space<vmem>>, vector<8x32xf32>,
      %cst_39 = arith.constant -1.000000e+30 : f32
      %75 = vector.broadcast %cst_39 : f32 to vector<8x1xf32>
      %c0_40 = arith.constant 0 : index
      %c0_41 = arith.constant 0 : index
      %76 = vector.load %arg8[%c0_40, %c0_41] : memref<8x1xf32, #tpu.memory_space<vmem>>, vector<8x1xf32>
      tpu.vector_store %arg8[%c0_40, %c0_41], %75 {strides = array<i32>} : memref<8x1xf32, #tpu.memory_space<vmem>>, vector<8x1xf32>,
      %cst_42 = arith.constant 0.000000e+00 : f32
      %77 = vector.broadcast %cst_42 : f32 to vector<8x1xf32>
      %c0_43 = arith.constant 0 : index
      %c0_44 = arith.constant 0 : index
      %78 = vector.load %arg9[%c0_43, %c0_44] : memref<8x1xf32, #tpu.memory_space<vmem>>, vector<8x1xf32>
      tpu.vector_store %arg9[%c0_43, %c0_44], %77 {strides = array<i32>} : memref<8x1xf32, #tpu.memory_space<vmem>>, vector<8x1xf32>,
      %cst_45 = arith.constant 0.000000e+00 : f32
      %79 = vector.broadcast %cst_45 : f32 to vector<8x1xf32>
      %c0_46 = arith.constant 0 : index
      %c0_47 = arith.constant 0 : index
      %80 = vector.load %arg10[%c0_46, %c0_47] : memref<8x1xf32, #tpu.memory_space<vmem>>, vector<8x1xf32>
      tpu.vector_store %arg10[%c0_46, %c0_47], %79 {strides = array<i32>} : memref<8x1xf32, #tpu.memory_space<vmem>>, vector<8x1xf32>,
    } else {
    }
    %c0 = arith.constant 0 : index
    %c0_1 = arith.constant 0 : index
    %3 = vector.load %arg7[%c0, %c0_1] : memref<8x32xf32, #tpu.memory_space<vmem>>, vector<8x32xf32>
    %c0_2 = arith.constant 0 : index
    %c0_3 = arith.constant 0 : index
    %4 = vector.load %arg3[%c0_2, %c0_3] : memref<128x32xf32, #tpu.memory_space<vmem>>, vector<128x32xf32>
    %cst = arith.constant dense<0.000000e+00> : vector<8x128xf32>
    %5 = tpu.matmul %3, %4, %cst {dimension_numbers = #tpu.dot_dimension_numbers<[1], [1], [0], [0], [0, 0, 1, 0], [], []>} : vector<8x32xf32>, vector<128x32xf32>, vector<8x128xf32> -> vector<8x128xf32>
    %c0_4 = arith.constant 0 : index
    %c0_5 = arith.constant 0 : index
    %6 = vector.load %arg4[%c0_4, %c0_5] : memref<1x128xf32, #tpu.memory_space<vmem>>, vector<1x128xf32>
    %7 = vector.broadcast %6 : vector<1x128xf32> to vector<8x128xf32>
    %8 = arith.mulf %5, %7 : vector<8x128xf32>
    %9 = arith.mulf %8, %8 : vector<8x128xf32>
    %cst_6 = arith.constant 1.000000e+00 : f32
    %10 = vector.broadcast %cst_6 : f32 to vector<8x128xf32>
    %11 = arith.subf %10, %9 : vector<8x128xf32>
    %cst_7 = arith.constant 0.000000e+00 : f32
    %12 = vector.broadcast %cst_7 : f32 to vector<8x128xf32>
    %13 = arith.maximumf %11, %12 : vector<8x128xf32>
    %14 = math.sqrt %13 : vector<8x128xf32>
    %cst_8 = arith.constant 3.000000e+01 : f32
    %15 = vector.broadcast %cst_8 : f32 to vector<8x128xf32>
    %16 = arith.mulf %8, %15 : vector<8x128xf32>
    %cst_9 = arith.constant 26.3274765 : f32
    %17 = vector.broadcast %cst_9 : f32 to vector<8x128xf32>
    %18 = arith.mulf %8, %17 : vector<8x128xf32>
    %cst_10 = arith.constant 14.3827658 : f32
    %19 = vector.broadcast %cst_10 : f32 to vector<8x128xf32>
    %20 = arith.mulf %14, %19 : vector<8x128xf32>
    %21 = arith.subf %18, %20 : vector<8x128xf32>
    %cst_11 = arith.constant -0.87758255 : f32
    %22 = vector.broadcast %cst_11 : f32 to vector<8x128xf32>
    %23 = arith.cmpf ogt, %8, %22 : vector<8x128xf32>
    %cst_12 = arith.constant 7.19138288 : f32
    %24 = vector.broadcast %cst_12 : f32 to vector<8x128xf32>
    %25 = arith.subf %16, %24 : vector<8x128xf32>
    %26 = arith.select %23, %21, %25 : vector<8x128xi1>, vector<8x128xf32>
    %c0_13 = arith.constant 0 : index
    %c0_14 = arith.constant 0 : index
    %27 = vector.load %arg5[%c0_13, %c0_14] : memref<8x1xi32, #tpu.memory_space<vmem>>, vector<8x1xi32>
    %28 = tpu.iota {dimensions = array<i32: 1>} : vector<8x128xi32>
    %c128_i32 = arith.constant 128 : i32
    %29 = arith.muli %arg1, %c128_i32 : i32
    %30 = vector.broadcast %29 : i32 to vector<8x128xi32>
    %31 = arith.addi %28, %30 : vector<8x128xi32>
    %32 = vector.broadcast %27 : vector<8x1xi32> to vector<8x128xi32>
    %33 = arith.cmpi eq, %31, %32 : vector<8x128xi32>
    %34 = arith.select %33, %26, %16 : vector<8x128xi1>, vector<8x128xf32>
    %c200_i32 = arith.constant 200 : i32
    %35 = vector.broadcast %c200_i32 : i32 to vector<8x128xi32>
    %36 = arith.cmpi slt, %31, %35 : vector<8x128xi32>
    %cst_15 = arith.constant -1.000000e+30 : f32
    %37 = vector.broadcast %cst_15 : f32 to vector<8x128xf32>
    %38 = arith.select %36, %34, %37 : vector<8x128xi1>, vector<8x128xf32>
    %c0_16 = arith.constant 0 : index
    %c0_17 = arith.constant 0 : index
    %39 = vector.load %arg8[%c0_16, %c0_17] : memref<8x1xf32, #tpu.memory_space<vmem>>, vector<8x1xf32>
    %cst_18 = arith.constant dense<0xFF800000> : vector<8xf32>
    %40 = vector.multi_reduction <maximumf>, %38, %cst_18 [1] : vector<8x128xf32> to vector<8xf32>
    %41 = vector.shape_cast %40 : vector<8xf32> to vector<8x1xf32>
    %42 = arith.maximumf %39, %41 : vector<8x1xf32>
    %43 = arith.subf %39, %42 : vector<8x1xf32>
    %44 = math.exp %43 : vector<8x1xf32>
    %45 = vector.broadcast %42 : vector<8x1xf32> to vector<8x128xf32>
    %46 = arith.subf %38, %45 : vector<8x128xf32>
    %47 = math.exp %46 : vector<8x128xf32>
    %c0_19 = arith.constant 0 : index
    %c0_20 = arith.constant 0 : index
    %48 = vector.load %arg9[%c0_19, %c0_20] : memref<8x1xf32, #tpu.memory_space<vmem>>, vector<8x1xf32>
    %49 = arith.mulf %44, %48 : vector<8x1xf32>
    %cst_21 = arith.constant dense<0.000000e+00> : vector<8xf32>
    %50 = vector.multi_reduction <add>, %47, %cst_21 [1] : vector<8x128xf32> to vector<8xf32>
    %51 = vector.shape_cast %50 : vector<8xf32> to vector<8x1xf32>
    %52 = arith.addf %49, %51 : vector<8x1xf32>
    %c0_22 = arith.constant 0 : index
    %c0_23 = arith.constant 0 : index
    %53 = vector.load %arg9[%c0_22, %c0_23] : memref<8x1xf32, #tpu.memory_space<vmem>>, vector<8x1xf32>
    tpu.vector_store %arg9[%c0_22, %c0_23], %52 {strides = array<i32>} : memref<8x1xf32, #tpu.memory_space<vmem>>, vector<8x1xf32>,
    %c0_24 = arith.constant 0 : index
    %c0_25 = arith.constant 0 : index
    %54 = vector.load %arg10[%c0_24, %c0_25] : memref<8x1xf32, #tpu.memory_space<vmem>>, vector<8x1xf32>
    %cst_26 = arith.constant 0.000000e+00 : f32
    %55 = vector.broadcast %cst_26 : f32 to vector<8x128xf32>
    %56 = arith.select %33, %38, %55 : vector<8x128xi1>, vector<8x128xf32>
    %cst_27 = arith.constant dense<0.000000e+00> : vector<8xf32>
    %57 = vector.multi_reduction <add>, %56, %cst_27 [1] : vector<8x128xf32> to vector<8xf32>
    %58 = vector.shape_cast %57 : vector<8xf32> to vector<8x1xf32>
    %59 = arith.addf %54, %58 : vector<8x1xf32>
    %c0_28 = arith.constant 0 : index
    %c0_29 = arith.constant 0 : index
    %60 = vector.load %arg10[%c0_28, %c0_29] : memref<8x1xf32, #tpu.memory_space<vmem>>, vector<8x1xf32>
    tpu.vector_store %arg10[%c0_28, %c0_29], %59 {strides = array<i32>} : memref<8x1xf32, #tpu.memory_space<vmem>>, vector<8x1xf32>,
    %c0_30 = arith.constant 0 : index
    %c0_31 = arith.constant 0 : index
    %61 = vector.load %arg8[%c0_30, %c0_31] : memref<8x1xf32, #tpu.memory_space<vmem>>, vector<8x1xf32>
    tpu.vector_store %arg8[%c0_30, %c0_31], %42 {strides = array<i32>} : memref<8x1xf32, #tpu.memory_space<vmem>>, vector<8x1xf32>,
    %c1_i32 = arith.constant 1 : i32
    %62 = arith.cmpi eq, %arg1, %c1_i32 : i32
    %63 = arith.extui %62 : i1 to i32
    %c0_i32_32 = arith.constant 0 : i32
    %64 = arith.cmpi ne, %63, %c0_i32_32 : i32
    scf.if %64 {
      %c0_33 = arith.constant 0 : index
      %c0_34 = arith.constant 0 : index
      %65 = vector.load %arg8[%c0_33, %c0_34] : memref<8x1xf32, #tpu.memory_space<vmem>>, vector<8x1xf32>
      %c0_35 = arith.constant 0 : index
      %c0_36 = arith.constant 0 : index
      %66 = vector.load %arg9[%c0_35, %c0_36] : memref<8x1xf32, #tpu.memory_space<vmem>>, vector<8x1xf32>
      %67 = math.log %66 : vector<8x1xf32>
      %68 = arith.addf %65, %67 : vector<8x1xf32>
      %c0_37 = arith.constant 0 : index
      %c0_38 = arith.constant 0 : index
      %69 = vector.load %arg10[%c0_37, %c0_38] : memref<8x1xf32, #tpu.memory_space<vmem>>, vector<8x1xf32>
      %70 = arith.subf %68, %69 : vector<8x1xf32>
      %c0_39 = arith.constant 0 : index
      %c0_40 = arith.constant 0 : index
      %71 = vector.load %arg6[%c0_39, %c0_40] : memref<8x1xf32, #tpu.memory_space<vmem>>, vector<8x1xf32>
      tpu.vector_store %arg6[%c0_39, %c0_40], %70 {strides = array<i32>} : memref<8x1xf32, #tpu.memory_space<vmem>>, vector<8x1xf32>,
    } else {
    }
    return
  }
  func.func @transform_0(%arg0: i32, %arg1: i32) -> (i32, i32) {
    %c0_i32 = arith.constant 0 : i32
    %c0_i32_0 = arith.constant 0 : i32
    return %arg0, %c0_i32 : i32, i32
  }
  func.func @transform_1(%arg0: i32, %arg1: i32) -> (i32, i32) {
    %c0_i32 = arith.constant 0 : i32
    %c0_i32_0 = arith.constant 0 : i32
    return %arg1, %c0_i32 : i32, i32
  }
  func.func @transform_2(%arg0: i32, %arg1: i32) -> (i32, i32) {
    %c0_i32 = arith.constant 0 : i32
    %c0_i32_0 = arith.constant 0 : i32
    return %c0_i32, %arg1 : i32, i32
  }
  func.func @transform_3(%arg0: i32, %arg1: i32) -> (i32, i32) {
    %c0_i32 = arith.constant 0 : i32
    %c0_i32_0 = arith.constant 0 : i32
    return %arg0, %c0_i32 : i32, i32
  }
  func.func @transform_4(%arg0: i32, %arg1: i32) -> (i32, i32) {
    %c0_i32 = arith.constant 0 : i32
    %c0_i32_0 = arith.constant 0 : i32
    return %arg0, %c0_i32 : i32, i32
  }
}

</mosaic_0001>

<llo_original>
// kernel: tpu_custom_call.1
$region0: #{tpu_custom_call.1}
  #allocation0 [shape = 'u32[]', space=smem, size = 0x4, offset = 0x4, fixed_abs, tag = 'smem constant byte address 0x4 - core index']
  #allocation1 [shape = 'u32[144,128]{1,0:T(1,128)}', space=vmem, size = 0x12000, scoped, tag = 'internal scratch']
  #allocation2 [shape = 'f32[8,32]{1,0:T(8,128)}', space=vmem, size = 0x1000, scoped, tag = 'scratch operand']
  #allocation3 [shape = 'f32[8,1]{1,0:T(8,128)}', space=vmem, size = 0x1000, scoped, tag = 'scratch operand']
  #allocation4 [shape = 'f32[8,1]{1,0:T(8,128)}', space=vmem, size = 0x1000, scoped, tag = 'scratch operand']
  #allocation5 [shape = 'f32[8,1]{1,0:T(8,128)}', space=vmem, size = 0x1000, scoped, tag = 'scratch operand']
  %s0 = inlined_call_operand.vmem [shape: f32[16,32], index: 0, kind: input, shape index: {}]
  %s1 = inlined_call_operand.vmem [shape: f32[256,32], index: 1, kind: input, shape index: {}]
  %s2 = inlined_call_operand.vmem [shape: f32[1,256], index: 2, kind: input, shape index: {}]
  %s3 = inlined_call_operand.vmem [shape: s32[16,1], index: 3, kind: input, shape index: {}]
  %s4 = inlined_call_operand.vmem [shape: f32[16,1], index: 4, kind: output, shape index: {}]
  %s5 = sld [smem:[#allocation0]]
  $region57: #{tpu_custom_call.1} parent=0
    _
  %s7 = ssub.s32 1, %s5
  %s8 = scalar_select 0, %s7, %s5
  loop: start=0, step=1, limit=6
  $region2: #{tpu_custom_call.1} parent=0 // loop_pre_header
    _
  $region3: #{tpu_custom_call.1} parent=0 // loop_header
    %s10 = sphi 0, %s14
    %p11 = scmp.ge.s32.totalorder %s10, 6
    %s17 = sphi 0, %s29
    %s18 = sphi 0, %s25
    %s19 = sphi 0, %s17
    %s20 = sphi 0, %s18
    %s21 = sphi 0, %s19
    %s22 = sphi 0, %s20
    %s32 = sphi 0, %s34
    %s35 = sphi 0, %s32
    %s36 = sphi 0, %s35
    %s52 = sphi 0, %s36
    %s58 = sphi 0, %s60
    %s61 = sphi 0, %s58
    %s62 = sphi 0, %s61
    %s78 = sphi 0, %s62
    %s84 = sphi 0, %s86
    %s87 = sphi 0, %s84
    %s88 = sphi 0, %s87
    %s104 = sphi 0, %s88
    %s110 = sphi 0, %s112
    %s113 = sphi 0, %s110
    %s114 = sphi 0, %s113
    %s130 = sphi 0, %s114
    %s136 = sphi 0, %s138
    %s139 = sphi 0, %s136
    %s140 = sphi 0, %s139
    %s156 = sphi 0, %s140
  $region4: #{tpu_custom_call.1} parent=0 // loop_header_branch
    %13 = sbr.rel (%p11) target = $region8
  $region5: #{tpu_custom_call.1} parent=0 // loop_body
    %s15 = ssub.s32 %s10, 1
    %s16 = ssub.s32 %s10, 2
    %s23 = sadd.s32 1, %s18
    %p24 = scmp.ge.s32.totalorder %s23, 2
    %s25 = scalar_select %p24, 0, %s23
    %s26 = sadd.s32 1, %s17
    %s27 = scalar_select %p24, %s26, %s17
    %p28 = scmp.ge.s32.totalorder %s27, 2
    %s29 = scalar_select %p28, 0, %s27
    %s30 = ssub.s32 %s17, %s29
    %p31 = scmp.eq.s32.totalorder %s30, 0
    %s33 = sadd.s32 %s32, 1
    %s34 = scalar_select %p31, %s32, %s33
    %p37 = pneg %p31
    %p38 = scmp.eq.s32.totalorder %s10, 3
    %p39 = por %p37, %p38
    %p40 = scmp.ne.s32.totalorder %s32, %s35
    %p41 = scmp.eq.s32.totalorder %s10, 0
    %p42 = por %p40, %p41
    %p43 = scmp.ne.s32.totalorder %s32, %s35
    %p44 = scmp.eq.s32.totalorder %s15, 3
    %p45 = por %p43, %p44
    %p46 = scmp.ne.s32.totalorder %s35, %s36
    %p47 = scmp.eq.s32.totalorder %s15, 0
    %p48 = por %p46, %p47
    %p49 = scmp.ne.s32.totalorder %s35, %s36
    %p50 = scmp.eq.s32.totalorder %s16, 3
    %p51 = por %p49, %p50
    %p53 = scmp.ne.s32.totalorder %s36, %s52
    %p54 = scmp.eq.s32.totalorder %s16, 0
    %p55 = por %p53, %p54
    %s56 = ssub.s32 %s18, %s25
    %p57 = scmp.eq.s32.totalorder %s56, 0
    %s59 = sadd.s32 %s58, 1
    %s60 = scalar_select %p57, %s58, %s59
    %p63 = pneg %p57
    %p64 = scmp.eq.s32.totalorder %s10, 3
    %p65 = por %p63, %p64
    %p66 = scmp.ne.s32.totalorder %s58, %s61
    %p67 = scmp.eq.s32.totalorder %s10, 0
    %p68 = por %p66, %p67
    %p69 = scmp.ne.s32.totalorder %s58, %s61
    %p70 = scmp.eq.s32.totalorder %s15, 3
    %p71 = por %p69, %p70
    %p72 = scmp.ne.s32.totalorder %s61, %s62
    %p73 = scmp.eq.s32.totalorder %s15, 0
    %p74 = por %p72, %p73
    %p75 = scmp.ne.s32.totalorder %s61, %s62
    %p76 = scmp.eq.s32.totalorder %s16, 3
    %p77 = por %p75, %p76
    %p79 = scmp.ne.s32.totalorder %s62, %s78
    %p80 = scmp.eq.s32.totalorder %s16, 0
    %p81 = por %p79, %p80
    %s82 = ssub.s32 %s18, %s25
    %p83 = scmp.eq.s32.totalorder %s82, 0
    %s85 = sadd.s32 %s84, 1
    %s86 = scalar_select %p83, %s84, %s85
    %p89 = pneg %p83
    %p90 = scmp.eq.s32.totalorder %s10, 3
    %p91 = por %p89, %p90
    %p92 = scmp.ne.s32.totalorder %s84, %s87
    %p93 = scmp.eq.s32.totalorder %s10, 0
    %p94 = por %p92, %p93
    %p95 = scmp.ne.s32.totalorder %s84, %s87
    %p96 = scmp.eq.s32.totalorder %s15, 3
    %p97 = por %p95, %p96
    %p98 = scmp.ne.s32.totalorder %s87, %s88
    %p99 = scmp.eq.s32.totalorder %s15, 0
    %p100 = por %p98, %p99
    %p101 = scmp.ne.s32.totalorder %s87, %s88
    %p102 = scmp.eq.s32.totalorder %s16, 3
    %p103 = por %p101, %p102
    %p105 = scmp.ne.s32.totalorder %s88, %s104
    %p106 = scmp.eq.s32.totalorder %s16, 0
    %p107 = por %p105, %p106
    %s108 = ssub.s32 %s17, %s29
    %p109 = scmp.eq.s32.totalorder %s108, 0
    %s111 = sadd.s32 %s110, 1
    %s112 = scalar_select %p109, %s110, %s111
    %p115 = pneg %p109
    %p116 = scmp.eq.s32.totalorder %s10, 3
    %p117 = por %p115, %p116
    %p118 = scmp.ne.s32.totalorder %s110, %s113
    %p119 = scmp.eq.s32.totalorder %s10, 0
    %p120 = por %p118, %p119
    %p121 = scmp.ne.s32.totalorder %s110, %s113
    %p122 = scmp.eq.s32.totalorder %s15, 3
    %p123 = por %p121, %p122
    %p124 = scmp.ne.s32.totalorder %s113, %s114
    %p125 = scmp.eq.s32.totalorder %s15, 0
    %p126 = por %p124, %p125
    %p127 = scmp.ne.s32.totalorder %s113, %s114
    %p128 = scmp.eq.s32.totalorder %s16, 3
    %p129 = por %p127, %p128
    %p131 = scmp.ne.s32.totalorder %s114, %s130
    %p132 = scmp.eq.s32.totalorder %s16, 0
    %p133 = por %p131, %p132
    %s134 = ssub.s32 %s17, %s29
    %p135 = scmp.eq.s32.totalorder %s134, 0
    %s137 = sadd.s32 %s136, 1
    %s138 = scalar_select %p135, %s136, %s137
    %p141 = pneg %p135
    %p142 = scmp.eq.s32.totalorder %s10, 3
    %p143 = por %p141, %p142
    %p144 = scmp.ne.s32.totalorder %s136, %s139
    %p145 = scmp.eq.s32.totalorder %s10, 0
    %p146 = por %p144, %p145
    %p147 = scmp.ne.s32.totalorder %s136, %s139
    %p148 = scmp.eq.s32.totalorder %s15, 3
    %p149 = por %p147, %p148
    %p150 = scmp.ne.s32.totalorder %s139, %s140
    %p151 = scmp.eq.s32.totalorder %s15, 0
    %p152 = por %p150, %p151
    %p153 = scmp.ne.s32.totalorder %s139, %s140
    %p154 = scmp.eq.s32.totalorder %s16, 3
    %p155 = por %p153, %p154
    %p157 = scmp.ne.s32.totalorder %s140, %s156
    %p158 = scmp.eq.s32.totalorder %s16, 0
    %p159 = por %p157, %p158
    %p160 = scmp.le.s32.totalorder 1, %s10
    %p161 = scmp.lt.s32.totalorder %s10, 5
    %p162 = pnand %p160, %p161
    %p163 = pneg %p162
    // Predicated region
    $region9: #{tpu_custom_call.1} parent=5 // pred_check
      _
    $region10: #{tpu_custom_call.1} parent=5 // pred_check_branch
      %165 = sbr.rel (%p162) target = $region12
    $region11: #{tpu_custom_call.1} parent=5 // pred_region
      %s166 = ssub.s32 %s10, 1
    $region12: #{tpu_custom_call.1} parent=5 // pred_fallthru
      _
    %p167 = scmp.lt.s32.totalorder %s10, 4
    // Predicated region
    $region13: #{tpu_custom_call.1} parent=5 // pred_check
      %p168 = pneg %p167
    $region14: #{tpu_custom_call.1} parent=5 // pred_check_branch
      %170 = sbr.rel (%p168) target = $region16
    $region15: #{tpu_custom_call.1} parent=5 // pred_region
      // Predicated region
      $region17: #{tpu_custom_call.1} parent=15 // pred_check
        %p171 = pneg %p42
      $region18: #{tpu_custom_call.1} parent=15 // pred_check_branch
        %173 = sbr.rel (%p171) target = $region20
      $region19: #{tpu_custom_call.1} parent=15 // pred_region
        %p174 = scmp.lt.s32.totalorder %s17, 1
        %s175 = scalar_select %p174, %s17, 1
        %s176 = smul.addr %s175, 8
        %s177 = scalar_lea.vmem %s0, %s176
      $region20: #{tpu_custom_call.1} parent=15 // pred_fallthru
        _
      // Predicated region
      $region21: #{tpu_custom_call.1} parent=15 // pred_check
        %p178 = pneg %p68
      $region22: #{tpu_custom_call.1} parent=15 // pred_check_branch
        %180 = sbr.rel (%p178) target = $region24
      $region23: #{tpu_custom_call.1} parent=15 // pred_region
        %s181 = smul.u32 16, %s18
        %p182 = scmp.lt.s32.totalorder %s181, 31
        %s183 = scalar_select %p182, %s181, 31
        %s184 = smul.addr %s183, 8
        %s185 = scalar_lea.vmem %s1, %s184
        %s186 = smul.u32 16, %s18
      $region24: #{tpu_custom_call.1} parent=15 // pred_fallthru
        _
      // Predicated region
      $region25: #{tpu_custom_call.1} parent=15 // pred_check
        %p187 = pneg %p94
      $region26: #{tpu_custom_call.1} parent=15 // pred_check_branch
        %189 = sbr.rel (%p187) target = $region28
      $region27: #{tpu_custom_call.1} parent=15 // pred_region
        %p190 = scmp.lt.s32.totalorder %s18, 1
        %s191 = scalar_select %p190, %s18, 1
        %s192 = scalar_lea.vmem %s2, %s191
      $region28: #{tpu_custom_call.1} parent=15 // pred_fallthru
        _
      // Predicated region
      $region29: #{tpu_custom_call.1} parent=15 // pred_check
        %p193 = pneg %p120
      $region30: #{tpu_custom_call.1} parent=15 // pred_check_branch
        %195 = sbr.rel (%p193) target = $region32
      $region31: #{tpu_custom_call.1} parent=15 // pred_region
        %p196 = scmp.lt.s32.totalorder %s17, 1
        %s197 = scalar_select %p196, %s17, 1
        %s198 = smul.addr %s197, 8
        %s199 = scalar_lea.vmem %s3, %s198
      $region32: #{tpu_custom_call.1} parent=15 // pred_fallthru
        _
    $region16: #{tpu_custom_call.1} parent=5 // pred_fallthru
      _
    %p200 = scmp.le.s32.totalorder 1, %s10
    %p201 = scmp.lt.s32.totalorder %s10, 5
    %p202 = pnand %p200, %p201
    %p203 = pneg %p202
    // Predicated region
    $region33: #{tpu_custom_call.1} parent=5 // pred_check
      _
    $region34: #{tpu_custom_call.1} parent=5 // pred_check_branch
      %205 = sbr.rel (%p202) target = $region36
    $region35: #{tpu_custom_call.1} parent=5 // pred_region
      %s206 = ssub.s32 %s10, 1
      %p207 = scmp.lt.s32.totalorder %s19, 1
      %s208 = scalar_select %p207, %s19, 1
      %s209 = smul.addr %s208, 8
      %s210 = scalar_lea.vmem %s0, %s209
      %p211 = pneg %p48
      %p212 = pneg %p45
      %s213 = smul.u32 16, %s20
      %p214 = scmp.lt.s32.totalorder %s213, 31
      %s215 = scalar_select %p214, %s213, 31
      %s216 = smul.addr %s215, 8
      %s217 = scalar_lea.vmem %s1, %s216
      %p218 = pneg %p74
      %p219 = pneg %p71
      %p220 = scmp.lt.s32.totalorder %s20, 1
      %s221 = scalar_select %p220, %s20, 1
      %s222 = scalar_lea.vmem %s2, %s221
      %p223 = pneg %p100
      %p224 = pneg %p97
      %p225 = scmp.lt.s32.totalorder %s19, 1
      %s226 = scalar_select %p225, %s19, 1
      %s227 = smul.addr %s226, 8
      %s228 = scalar_lea.vmem %s3, %s227
      %p229 = pneg %p126
      %p230 = pneg %p123
      %p231 = pneg %p152
      %p232 = pneg %p149
      %p233 = scmp.lt.s32.totalorder %s19, 1
      %s234 = scalar_select %p233, %s19, 1
      %s235 = smul.addr %s234, 8
      %s236 = scalar_lea.vmem %s4, %s235
      %p237 = scmp.lt.s32.totalorder %s19, 1
      %s238 = scalar_select %p237, %s19, 1
      %s239 = smul.addr %s238, 8
      %s240 = scalar_lea.vmem %s0, %s239
      %s241 = smul.u32 16, %s20
      %p242 = scmp.lt.s32.totalorder %s241, 31
      %s243 = scalar_select %p242, %s241, 31
      %s244 = smul.addr %s243, 8
      %s245 = scalar_lea.vmem %s1, %s244
      %s246 = smul.u32 16, %s20
      %p247 = scmp.lt.s32.totalorder %s20, 1
      %s248 = scalar_select %p247, %s20, 1
      %s249 = scalar_lea.vmem %s2, %s248
      %p250 = scmp.lt.s32.totalorder %s19, 1
      %s251 = scalar_select %p250, %s19, 1
      %s252 = smul.addr %s251, 8
      %s253 = scalar_lea.vmem %s3, %s252
      %p254 = scmp.lt.s32.totalorder %s19, 1
      %s255 = scalar_select %p254, %s19, 1
      %s256 = smul.addr %s255, 8
      %s257 = scalar_lea.vmem %s4, %s256
      %p258 = scmp.eq.s32.totalorder %s20, 0
      // Predicated region
      $region37: #{tpu_custom_call.1} parent=35 // pred_check
        %p259 = pneg %p258
      $region38: #{tpu_custom_call.1} parent=35 // pred_check_branch
        %261 = sbr.rel (%p259) target = $region40
      $region39: #{tpu_custom_call.1} parent=35 // pred_region
        %v262 = vld [vmem:[%s240] sm:$0xff]
        %v263 = vmul.f32 %v262, %v262
        %vm264 = vcmask 261120
        %v265 = vsel %vm264, %v263, 0.0
        %266 = vadd.xlane.f32.xlu0 %v265
        %v267 = vpop.xlane.xlu0 %266
        %v268 = vmax.f32 %v267, 1e-24
        %v269 = vrsqrt.pop %v268
        %v270 = vmul.f32 %v262, %v269
        %271 = vst.msk [vmem:[#allocation2] sm:$0xff] %vm264, %v270
        %vm272 = vcmask 7168
        %273 = vst.msk [vmem:[#allocation3] sm:$0xff] %vm272, -1e+30
        %274 = vst.msk [vmem:[#allocation4] sm:$0xff] %vm272, 0.0
        %275 = vst.msk [vmem:[#allocation5] sm:$0xff] %vm272, 0.0
      $region40: #{tpu_custom_call.1} parent=35 // pred_fallthru
        _
      %v276 = vld [vmem:[#allocation2] sm:$0xff]
      %v277 = vld [vmem:[%s245] sm:$0xff]
      %v278 = vld [vmem:[%s245 + $0x8] sm:$0xff]
      %v279 = vld [vmem:[%s245 + $0x10] sm:$0xff]
      %v280 = vld [vmem:[%s245 + $0x18] sm:$0xff]
      %v281 = vld [vmem:[%s245 + $0x20] sm:$0xff]
      %v282 = vld [vmem:[%s245 + $0x28] sm:$0xff]
      %v283 = vld [vmem:[%s245 + $0x30] sm:$0xff]
      %v284 = vld [vmem:[%s245 + $0x38] sm:$0xff]
      %v285 = vld [vmem:[%s245 + $0x40] sm:$0xff]
      %v286 = vld [vmem:[%s245 + $0x48] sm:$0xff]
      %v287 = vld [vmem:[%s245 + $0x50] sm:$0xff]
      %v288 = vld [vmem:[%s245 + $0x58] sm:$0xff]
      %v289 = vld [vmem:[%s245 + $0x60] sm:$0xff]
      %v290 = vld [vmem:[%s245 + $0x68] sm:$0xff]
      %v291 = vld [vmem:[%s245 + $0x70] sm:$0xff]
      %v292 = vld [vmem:[%s245 + $0x78] sm:$0xff]
      %vm293 = vcmask 261120
      %v295 = vsel %vm293, %v276, 0
      %v298 = vsel %vm293, %v277, 0
      %v301 = vsel %vm293, %v278, 0
      %v304 = vsel %vm293, %v279, 0
      %v307 = vsel %vm293, %v280, 0
      %v310 = vsel %vm293, %v281, 0
      %v313 = vsel %vm293, %v282, 0
      %v316 = vsel %vm293, %v283, 0
      %v319 = vsel %vm293, %v284, 0
      %v322 = vsel %vm293, %v285, 0
      %v325 = vsel %vm293, %v286, 0
      %v328 = vsel %vm293, %v287, 0
      %v331 = vsel %vm293, %v288, 0
      %v334 = vsel %vm293, %v289, 0
      %v337 = vsel %vm293, %v290, 0
      %v340 = vsel %vm293, %v291, 0
      %v343 = vsel %vm293, %v292, 0
      %345 = vmatprep.subr.mxu0 0.0
      %346 = vmatpush1.xpose.msra.mxu0 %v298
      %347 = vmatprep.subr.mxu0 0.0
      %348 = vmatpush1.xpose.msra.mxu0 %v301
      %349 = vmatprep.subr.mxu0 0.0
      %350 = vmatpush1.xpose.msra.mxu0 %v304
      %351 = vmatprep.subr.mxu0 0.0
      %352 = vmatpush1.xpose.msra.mxu0 %v307
      %353 = vmatprep.subr.mxu0 0.0
      %354 = vmatpush1.xpose.msra.mxu0 %v310
      %355 = vmatprep.subr.mxu0 0.0
      %356 = vmatpush1.xpose.msra.mxu0 %v313
      %357 = vmatprep.subr.mxu0 0.0
      %358 = vmatpush1.xpose.msra.mxu0 %v316
      %359 = vmatprep.subr.mxu0 0.0
      %360 = vmatpush1.xpose.msra.mxu0 %v319
      %361 = vmatprep.subr.mxu0 0.0
      %362 = vmatpush1.xpose.msra.mxu0 %v322
      %363 = vmatprep.subr.mxu0 0.0
      %364 = vmatpush1.xpose.msra.mxu0 %v325
      %365 = vmatprep.subr.mxu0 0.0
      %366 = vmatpush1.xpose.msra.mxu0 %v328
      %367 = vmatprep.subr.mxu0 0.0
      %368 = vmatpush1.xpose.msra.mxu0 %v331
      %369 = vmatprep.subr.mxu0 0.0
      %370 = vmatpush1.xpose.msra.mxu0 %v334
      %371 = vmatprep.subr.mxu0 0.0
      %372 = vmatpush1.xpose.msra.mxu0 %v337
      %373 = vmatprep.subr.mxu0 0.0
      %374 = vmatpush1.xpose.msra.mxu0 %v340
      %375 = vmatprep.subr.mxu0 0.0
      %376 = vmatpush1.xpose.msra.mxu0 %v343
      %377 = vmatprep.subr.mxu0 0.0
      %378 = vmatpush1.xpose.msra.mxu0 0.0
      %379 = vmatprep.subr.mxu0 0.0
      %380 = vmatpush1.xpose.msra.mxu0 0.0
      %381 = vmatprep.subr.mxu0 0.0
      %382 = vmatpush1.xpose.msra.mxu0 0.0
      %383 = vmatprep.subr.mxu0 0.0
      %384 = vmatpush1.xpose.msra.mxu0 0.0
      %385 = vmatprep.subr.mxu0 0.0
      %386 = vmatpush1.xpose.msra.mxu0 0.0
      %387 = vmatprep.subr.mxu0 0.0
      %388 = vmatpush1.xpose.msra.mxu0 0.0
      %389 = vmatprep.subr.mxu0 0.0
      %390 = vmatpush1.xpose.msra.mxu0 0.0
      %391 = vmatprep.subr.mxu0 0.0
      %392 = vmatpush1.xpose.msra.mxu0 0.0
      %393 = vmatprep.subr.mxu0 0.0
      %394 = vmatpush1.xpose.msra.mxu0 0.0
      %395 = vmatprep.subr.mxu0 0.0
      %396 = vmatpush1.xpose.msra.mxu0 0.0
      %397 = vmatprep.subr.mxu0 0.0
      %398 = vmatpush1.xpose.msra.mxu0 0.0
      %399 = vmatprep.subr.mxu0 0.0
      %400 = vmatpush1.xpose.msra.mxu0 0.0
      %401 = vmatprep.subr.mxu0 0.0
      %402 = vmatpush1.xpose.msra.mxu0 0.0
      %403 = vmatprep.subr.mxu0 0.0
      %404 = vmatpush1.xpose.msra.mxu0 0.0
      %405 = vmatprep.subr.mxu0 0.0
      %406 = vmatpush1.xpose.msra.mxu0 0.0
      %407 = vmatprep.subr.mxu0 0.0
      %408 = vmatpush1.xpose.msra.mxu0 0.0
      %409 = vmatprep.mubr.f32.mxu0 0.0
      %410 = vmatmul.mubr.f32.gmra.mrb[0].mxu0 %v295
      %v411 = vpop.f32.mrb[0].mxu0
      %v412 = vadd.f32 0.0, %v411
      %v413 = vpop.f32.mrb[0].mxu0
      %414 = vdwg.mxu0
      %v415 = vld [vmem:[%s249] sm:$0x1]
      %v417 = vlaneseq
      %v418 = vshrl.u32 %v417, 7
      %v419 = vsub.s32 0, %v418
      %v420 = vrot.slane %v415, %v419
      %v422 = vmul.f32 %v412, %v420
      %v423 = vmul.f32 %v422, %v422
      %v424 = vsub.f32 1.0, %v423
      %v425 = vmax.f32 %v424, 0.0
      %v426 = vrsqrt.pop %v425
      %v427 = vmul.f32 %v425, %v426
      %vm428 = vcmp.eq.f32.partialorder %v425, inf
      %v429 = vsel %vm428, %v425, %v427
      %vm430 = vcmp.eq.f32.partialorder %v425, 0.0
      %v431 = vand.u32 %v425, 2147483648
      %v432 = vsel %vm430, %v431, %v429
      %v433 = vmul.f32 %v422, 30.0
      %v434 = vmul.f32 %v422, 26.327477
      %v435 = vmul.f32 %v432, 14.382766
      %v436 = vsub.f32 %v434, %v435
      %vm437 = vcmp.gt.f32.partialorder %v422, -0.87758255
      %v438 = vsub.f32 %v433, 7.191383
      %v439 = vsel %vm437, %v436, %v438
      %v440 = vld [vmem:[%s253] sm:$0xff]
      %v441 = vlaneseq
      %v442 = vand.u32 %v441, 127
      %s443 = smul.u32 %s20, 128
      %v444 = vstv %s443
      %v445 = vadd.s32 %v442, %v444
      %446 = vset.pattern.permute.xlu0 0
      %447 = vperm.xlu0 %446, %v440
      %v448 = vpop.permute.xlu0 %447
      %vm449 = vcmp.eq.s32.totalorder %v445, %v448
      %v450 = vsel %vm449, %v439, %v433
      %vm451 = vcmp.lt.s32.totalorder %v445, 200
      %v452 = vsel %vm451, %v450, -1e+30
      %v453 = vld [vmem:[#allocation3] sm:$0xff]
      %454 = vmax.xlane.f32.xlu0 %v452
      %v455 = vpop.xlane.xlu0 %454
      %v456 = vmax.f32 %v453, %v455
      %v457 = vsub.f32 %v453, %v456
      %v458 = vmul.f32 %v457, 1.442695
      %v459 = vpow.pop %v458
      %461 = vset.pattern.permute.xlu0 0
      %462 = vperm.xlu0 %461, %v456
      %v463 = vpop.permute.xlu0 %462
      %v465 = vsub.f32 %v452, %v463
      %v466 = vmul.f32 %v465, 1.442695
      %v467 = vpow.pop %v466
      %v468 = vld [vmem:[#allocation4] sm:$0xff]
      %v469 = vmul.f32 %v459, %v468
      %470 = vadd.xlane.f32.xlu0 %v467
      %v471 = vpop.xlane.xlu0 %470
      %v472 = vadd.f32 %v469, %v471
      %vm473 = vcmask 7168
      %474 = vst.msk [vmem:[#allocation4] sm:$0xff] %vm473, %v472
      %v475 = vld [vmem:[#allocation5] sm:$0xff]
      %v476 = vsel %vm449, %v452, 0.0
      %477 = vadd.xlane.f32.xlu0 %v476
      %v478 = vpop.xlane.xlu0 %477
      %v479 = vadd.f32 %v475, %v478
      %480 = vst.msk [vmem:[#allocation5] sm:$0xff] %vm473, %v479
      %481 = vst.msk [vmem:[#allocation3] sm:$0xff] %vm473, %v456
      %p482 = scmp.eq.s32.totalorder %s20, 1
      // Predicated region
      $region41: #{tpu_custom_call.1} parent=35 // pred_check
        %p483 = pneg %p482
      $region42: #{tpu_custom_call.1} parent=35 // pred_check_branch
        %485 = sbr.rel (%p483) target = $region44
      $region43: #{tpu_custom_call.1} parent=35 // pred_region
        %v486 = vld [vmem:[#allocation3] sm:$0xff]
        %v487 = vld [vmem:[#allocation4] sm:$0xff]
        %v488 = vlog2.pop %v487
        %v489 = vmul.f32 %v488, 0.6931472
        %v490 = vadd.f32 %v486, %v489
        %v491 = vld [vmem:[#allocation5] sm:$0xff]
        %v492 = vsub.f32 %v490, %v491
        %493 = vst.msk [vmem:[%s257] sm:$0xff] %vm473, %v492
      $region44: #{tpu_custom_call.1} parent=35 // pred_fallthru
        _
      %p494 = scmp.lt.s32.totalorder %s19, 1
      %s495 = scalar_select %p494, %s19, 1
      %s496 = smul.addr %s495, 8
      %s497 = scalar_lea.vmem %s4, %s496
      // Predicated region
      $region45: #{tpu_custom_call.1} parent=35 // pred_check
        %p498 = pneg %p149
      $region46: #{tpu_custom_call.1} parent=35 // pred_check_branch
        %500 = sbr.rel (%p498) target = $region48
      $region47: #{tpu_custom_call.1} parent=35 // pred_region
        _
      $region48: #{tpu_custom_call.1} parent=35 // pred_fallthru
        _
    $region36: #{tpu_custom_call.1} parent=5 // pred_fallthru
      _
    %p501 = scmp.le.s32.totalorder 2, %s10
    // Predicated region
    $region49: #{tpu_custom_call.1} parent=5 // pred_check
      %p502 = pneg %p501
    $region50: #{tpu_custom_call.1} parent=5 // pred_check_branch
      %504 = sbr.rel (%p502) target = $region52
    $region51: #{tpu_custom_call.1} parent=5 // pred_region
      %s505 = ssub.s32 %s10, 2
      // Predicated region
      $region53: #{tpu_custom_call.1} parent=51 // pred_check
        %p506 = pneg %p155
      $region54: #{tpu_custom_call.1} parent=51 // pred_check_branch
        %508 = sbr.rel (%p506) target = $region56
      $region55: #{tpu_custom_call.1} parent=51 // pred_region
        %p509 = scmp.lt.s32.totalorder %s21, 1
        %s510 = scalar_select %p509, %s21, 1
        %s511 = smul.addr %s510, 8
        %s512 = scalar_lea.vmem %s4, %s511
      $region56: #{tpu_custom_call.1} parent=51 // pred_fallthru
        _
    $region52: #{tpu_custom_call.1} parent=5 // pred_fallthru
      _
  $region6: #{tpu_custom_call.1} parent=0 // loop_footer
    %s14 = sadd.s32 1, %s10
  $region7: #{tpu_custom_call.1} parent=0 // loop_footer_branch
    %9 = sbr.rel target = $region3
  $region8: #{tpu_custom_call.1} parent=0 // loop_exit
    _

</llo_original>
